<compile_context>
chip_gen: v5e
topology: v5e:2x2
jax: 0.10.0
libtpu: 0.0.40
codegen_flags: <defaults>
</compile_context>

<pallas_src>
import functools

import numpy as np
import jax
import jax.numpy as jnp
from jax import lax
from jax.experimental import pallas as pl
from jax.experimental.pallas import tpu as pltpu


def _round_up(x: int, m: int) -> int:
    return -(-x // m) * m


# ---------------------------------------------------------------------------
# Interpolation weight matrices (numpy, built once per shape and cached)
# ---------------------------------------------------------------------------
@functools.lru_cache(maxsize=None)
def _bilinear_matrix(in_size: int, out_size: int, align_corners: bool) -> np.ndarray:
    out_coords = np.arange(out_size, dtype=np.float64)
    if align_corners:
        if out_size > 1:
            in_coords = out_coords * ((in_size - 1) / (out_size - 1))
        else:
            in_coords = np.zeros_like(out_coords)        # single output -> src 0
    else:
        in_coords = (out_coords + 0.5) * (in_size / out_size) - 0.5
        in_coords = np.maximum(in_coords, 0.0)           # PyTorch clamps below at 0
    i0 = np.clip(np.floor(in_coords).astype(np.int64), 0, in_size - 1)
    i1 = np.minimum(i0 + 1, in_size - 1)
    w1 = (in_coords - i0).astype(np.float32)
    w0 = (1.0 - w1).astype(np.float32)
    a = np.zeros((out_size, in_size), np.float32)
    rows = np.arange(out_size)
    np.add.at(a, (rows, i0), w0)
    np.add.at(a, (rows, i1), w1)
    return a


@functools.lru_cache(maxsize=None)
def _nearest_matrix(in_size: int, out_size: int) -> np.ndarray:
    # PyTorch legacy 'nearest': src = floor(dst * in/out)
    src = np.floor(np.arange(out_size, dtype=np.float64) * (in_size / out_size))
    src = np.clip(src.astype(np.int64), 0, in_size - 1)
    a = np.zeros((out_size, in_size), np.float32)
    a[np.arange(out_size), src] = 1.0
    return a


# ---------------------------------------------------------------------------
# Pallas kernel: fused W-pass matmul + block-diagonal grouped H-pass
# ---------------------------------------------------------------------------
def _make_resize_kernel(n_groups: int, g: int, h_pad: int, oh_pad: int,
                        upcast: bool):
    gh = g * h_pad          # tmp rows per group (multiple of 8)
    go = g * oh_pad         # output rows per group (multiple of 8)

    def kernel(x_ref, ahbd_ref, awt_ref, o_ref, tmp_ref):
        # ---- W-pass: ONE fused MXU matmul over every plane in the block.
        x2 = x_ref[...]                       # (B*H_pad, W_in) — no reshape needed
        if upcast:
            x2 = x2.astype(jnp.float32)       # int / fp8 inputs -> f32 compute
        tmp_ref[...] = jnp.dot(x2, awt_ref[...],
                               preferred_element_type=jnp.float32)

        # ---- H-pass: block-diagonal A_h covers g planes per MXU matmul
        #      (K = g*H_pad ~ 256 fills the MXU contraction depth).
        ahbd = ahbd_ref[...]                  # (g*OH_pad, g*H_pad), f32

        def h_pass(i, carry):
            r_in = pl.multiple_of(i * gh, gh)
            r_out = pl.multiple_of(i * go, go)
            t = tmp_ref[pl.ds(r_in, gh), :]   # (g*H_pad, W_out), aligned slice
            o_ref[pl.ds(r_out, go), :] = jnp.dot(
                ahbd, t, preferred_element_type=jnp.float32).astype(o_ref.dtype)
            return carry

        lax.fori_loop(0, n_groups, h_pass, 0, unroll=min(n_groups, 4))

    return kernel


# ---------------------------------------------------------------------------
# Wrapper: block-size selection, padding, BlockSpecs, VMEM budgeting
# ---------------------------------------------------------------------------
def _tile_bytes(rows: int, cols: int, itemsize: int) -> int:
    """VMEM footprint of a (rows, cols) tile after (sublane, 128)-padding."""
    sub = {4: 8, 2: 16, 1: 32}.get(itemsize, 8)
    return _round_up(rows, sub) * _round_up(cols, 128) * itemsize


def _vmem_capacity_bytes() -> int:
    try:
        return int(pltpu.get_tpu_info().vmem_capacity_bytes)
    except Exception:
        return 64 * 1024 * 1024  # conservative fallback (v7x per-TensorCore VMEM)


def _pallas_resize(x, a_h_np: np.ndarray, a_w_np: np.ndarray):
    n, c, h, w = x.shape
    out_h, out_w = int(a_h_np.shape[0]), int(a_w_np.shape[0])
    nc = n * c
    itemsize = x.dtype.itemsize
    sub = {4: 8, 2: 16, 1: 32}.get(itemsize, 8)
    h_pad = _round_up(h, sub)
    oh_pad = _round_up(out_h, sub)

    # Only keep MXU weights in the input dtype for f32/bf16; for int/uint/fp8
    # (or f16) keep weights in f32 and upcast the input block inside the kernel
    # so fractional bilinear weights are not quantized away.
    native = x.dtype in (jnp.float32, jnp.bfloat16)
    cdtype = x.dtype if native else jnp.float32
    upcast = not native
    w_itemsize = jnp.dtype(cdtype).itemsize

    # ---- plane batch B and H-pass group size g ------------------------------
    plane_in = _tile_bytes(h_pad, w, itemsize)
    target_in = 6 << 20                       # ~6 MiB of input per grid step
    steps_target = 8                          # >= 4 steps per TC on 2-TC parts
    b = max(1, target_in // plane_in)
    b = max(b, -(-512 // h_pad))              # M = B*H_pad >= 512 for the W-pass
    if nc >= steps_target:
        b = min(b, -(-nc // steps_target))    # keep the pipeline >= 8 steps deep
    b = max(1, min(b, nc))

    k_target = 256                            # MXU contraction depth (v6e/v7x)
    g = max(1, min(k_target // h_pad, b))
    b = _round_up(b, g)                       # whole groups only

    def step_bytes(bb):
        return (2 * _tile_bytes(bb * h_pad, w, itemsize)         # in, dbl-buffered
                + 2 * _tile_bytes(bb * oh_pad, out_w, itemsize)   # out, dbl-buffered
                + _tile_bytes(bb * h_pad, out_w, 4)               # f32 intermediate
                + 2 * (_tile_bytes(g * oh_pad, g * h_pad, 4)      # weights
                       + _tile_bytes(w, out_w, w_itemsize)))

    vmem_budget = 40 << 20                    # v7x-safe (64 MiB/TC) with margin
    while b > g and step_bytes(b) > vmem_budget:
        b -= g
    while g > 1 and step_bytes(b) > vmem_budget:
        g = max(1, g // 2)
        b = g

    grid_len = -(-nc // b)
    nc_pad = grid_len * b

    # ---- flatten + pad input to a sublane-aligned 2-D slab -------------------
    xr = x.reshape(nc, h, w)
    if (nc_pad != nc) or (h_pad != h):
        xr = jnp.pad(xr, ((0, nc_pad - nc), (0, h_pad - h), (0, 0)))
    x_flat = xr.reshape(nc_pad * h_pad, w)

    # ---- weight matrices ------------------------------------------------------
    a_wt = jnp.asarray(a_w_np.T, dtype=cdtype)               # (W_in, W_out)
    a_h_pad_np = np.zeros((oh_pad, h_pad), np.float32)       # zero-padded rows/cols
    a_h_pad_np[:out_h, :h] = a_h_np
    a_h_bd = jnp.asarray(
        np.kron(np.eye(g, dtype=np.float32), a_h_pad_np))    # (g*OH_pad, g*H_pad)

    vmem_cap = _vmem_capacity_bytes()
    vmem_limit = int(step_bytes(b) * 1.25) + (4 << 20)
    vmem_limit = int(max(32 << 20, min(vmem_limit, vmem_cap)))

    kernel = _make_resize_kernel(b // g, g, h_pad, oh_pad, upcast)
    out_flat = pl.pallas_call(
        kernel,
        out_shape=jax.ShapeDtypeStruct((nc_pad * oh_pad, out_w), x.dtype),
        grid_spec=pltpu.PrefetchScalarGridSpec(
            num_scalar_prefetch=0,
            grid=(grid_len,),
            in_specs=[
                pl.BlockSpec((b * h_pad, w), lambda i: (i, 0)),
                pl.BlockSpec((g * oh_pad, g * h_pad), lambda i: (0, 0)),
                pl.BlockSpec((w, out_w), lambda i: (0, 0)),
            ],
            out_specs=pl.BlockSpec((b * oh_pad, out_w), lambda i: (i, 0)),
            scratch_shapes=[pltpu.VMEM((b * h_pad, out_w), jnp.float32)],
        ),
        compiler_params=pltpu.CompilerParams(
            dimension_semantics=("parallel",),
            vmem_limit_bytes=vmem_limit),
    )(x_flat, a_h_bd, a_wt)

    out = out_flat.reshape(nc_pad, oh_pad, out_w)[:nc, :out_h, :]
    return out.reshape(n, c, out_h, out_w)


# ---------------------------------------------------------------------------
# Interpolate module (JAX / Pallas port of the PyTorch module)
# ---------------------------------------------------------------------------
class Interpolate:
    __MODES__ = ['nearest', 'bilinear']
    # TODO(synk): 'linear', 'area', 'bicubic', 'trilinear' modes not ported.
    # TODO(synk): recompute_scale_factor is accepted but ignored.

    def __init__(self, scale: float = 0.0, width: int = -1, height: int = -1,
                 mode: str = 'bilinear', align_corners: bool = False,
                 recompute_scale_factor: bool = False,
                 preserve_aspect_ratio: bool = False):
        assert mode in Interpolate.__MODES__
        self.scale = scale
        self.mode = mode
        self.align_corners = align_corners
        self.preserve_aspect_ratio = preserve_aspect_ratio
        self.resolution = [height, width]
        self.use_scale = scale > 0.0 and width < 0 and height < 0

    def _calc_size(self, input_shape, target_shape):
        if self.preserve_aspect_ratio:
            h, w = target_shape
            if h > w:
                return (h, int(input_shape[1] * (h / input_shape[0])))
            else:
                return (int(input_shape[0] * (w / input_shape[1])), w)
        return tuple(target_shape)

    def _matrices(self, in_h, in_w, out_h, out_w):
        if self.mode == 'bilinear':
            a_h = _bilinear_matrix(in_h, out_h, self.align_corners)
            a_w = _bilinear_matrix(in_w, out_w, self.align_corners)
        else:  # nearest
            a_h = _nearest_matrix(in_h, out_h)
            a_w = _nearest_matrix(in_w, out_w)
        return a_h, a_w

    def __call__(self, image, target=None):
        n, c, in_h, in_w = image.shape
        if target is None and not self.preserve_aspect_ratio:
            if self.use_scale:
                out_h = int(in_h * self.scale)
                out_w = int(in_w * self.scale)
            else:
                out_h, out_w = self.resolution
        else:
            tgt_shape = target.shape[2:] if target is not None else self.resolution
            out_h, out_w = self._calc_size((in_h, in_w), tgt_shape)
        a_h, a_w = self._matrices(in_h, in_w, int(out_h), int(out_w))
        return _pallas_resize(image, a_h, a_w)


# ---------------------------------------------------------------------------
if __name__ == "__main__":
    key = jax.random.PRNGKey(0)
    x = jax.random.normal(key, (2, 4, 16, 16), dtype=jnp.float32)

    # Bilinear, align_corners=False, scale=2.0 (default module config)
    interp = Interpolate(scale=2.0, mode='bilinear', align_corners=False)
    out = jax.block_until_ready(interp(x))
    assert out.shape == (2, 4, 32, 32), out.shape
    a_h = jnp.asarray(_bilinear_matrix(16, 32, False))
    a_w = jnp.asarray(_bilinear_matrix(16, 32, False))
    ref = jnp.einsum('oh,nchw,pw->ncop', a_h, x, a_w)
    assert jnp.allclose(out, ref, atol=1e-4, rtol=1e-4)

    # Bilinear, align_corners=True, unaligned sizes (exercise H/OH padding path)
    x2 = jax.random.normal(jax.random.PRNGKey(1), (1, 3, 10, 12), dtype=jnp.float32)
    interp2 = Interpolate(width=9, height=17, mode='bilinear', align_corners=True)
    out2 = jax.block_until_ready(interp2(x2))
    assert out2.shape == (1, 3, 17, 9), out2.shape
    a_h2 = jnp.asarray(_bilinear_matrix(10, 17, True))
    a_w2 = jnp.asarray(_bilinear_matrix(12, 9, True))
    ref2 = jnp.einsum('oh,nchw,pw->ncop', a_h2, x2, a_w2)
    assert jnp.allclose(out2, ref2, atol=1e-4, rtol=1e-4)

    # Nearest, explicit size 32x32 (exact 2x so no floor-rounding ambiguity)
    interp_n = Interpolate(width=32, height=32, mode='nearest')
    out_n = jax.block_until_ready(interp_n(x))
    assert out_n.shape == (2, 4, 32, 32), out_n.shape
    idx = jnp.arange(32) // 2
    ref_n = x[:, :, idx][:, :, :, idx]
    assert jnp.allclose(out_n, ref_n, atol=1e-5)

    print("KERNEL_OK")
</pallas_src>

<mosaic_0001>
module attributes {stable_mosaic.version = 11 : i64} {
  func.func @kernel(%arg0: i32, %arg1: memref<16x16xf32, #tpu.memory_space<vmem>>, %arg2: memref<32x16xf32, #tpu.memory_space<vmem>>, %arg3: memref<16x32xf32, #tpu.memory_space<vmem>>, %arg4: memref<32x32xf32, #tpu.memory_space<vmem>>, %arg5: memref<16x32xf32, #tpu.memory_space<vmem>>) attributes {dimension_semantics = [#tpu.dimension_semantics<parallel>], iteration_bounds = array<i64: 8>, scalar_prefetch = 0 : i64, scratch_operands = 1 : i64, tpu.core_type = #tpu.core_type<tc>, window_params = [{transform_indices = @transform_0, window_bounds = array<i64: 16, 16>}, {pipeline_mode = #tpu.pipeline_mode<synchronous>, transform_indices = @transform_1, window_bounds = array<i64: 32, 16>}, {pipeline_mode = #tpu.pipeline_mode<synchronous>, transform_indices = @transform_2, window_bounds = array<i64: 16, 32>}, {transform_indices = @transform_3, window_bounds = array<i64: 32, 32>}]} {
    %c0 = arith.constant 0 : index
    %c0_0 = arith.constant 0 : index
    %0 = vector.load %arg1[%c0, %c0_0] : memref<16x16xf32, #tpu.memory_space<vmem>>, vector<16x16xf32>
    %c0_1 = arith.constant 0 : index
    %c0_2 = arith.constant 0 : index
    %1 = vector.load %arg3[%c0_1, %c0_2] : memref<16x32xf32, #tpu.memory_space<vmem>>, vector<16x32xf32>
    %cst = arith.constant dense<0.000000e+00> : vector<16x32xf32>
    %2 = tpu.matmul %0, %1, %cst {dimension_numbers = #tpu.dot_dimension_numbers<[1], [0], [0], [1], [0, 0, 1, 1], [], []>} : vector<16x16xf32>, vector<16x32xf32>, vector<16x32xf32> -> vector<16x32xf32>
    %c0_3 = arith.constant 0 : index
    %c0_4 = arith.constant 0 : index
    %3 = vector.load %arg5[%c0_3, %c0_4] : memref<16x32xf32, #tpu.memory_space<vmem>>, vector<16x32xf32>
    tpu.vector_store %arg5[%c0_3, %c0_4], %2 {strides = array<i32>} : memref<16x32xf32, #tpu.memory_space<vmem>>, vector<16x32xf32>,
    %c0_5 = arith.constant 0 : index
    %c0_6 = arith.constant 0 : index
    %4 = vector.load %arg2[%c0_5, %c0_6] : memref<32x16xf32, #tpu.memory_space<vmem>>, vector<32x16xf32>
    %c0_i32 = arith.constant 0 : i32
    %c16_i32 = arith.constant 16 : i32
    %5 = arith.muli %c0_i32, %c16_i32 : i32
    %6 = tpu.assume_multiple %5, 16 : i32
    %c32_i32 = arith.constant 32 : i32
    %7 = arith.muli %c0_i32, %c32_i32 : i32
    %8 = tpu.assume_multiple %7, 32 : i32
    %9 = arith.index_cast %6 : i32 to index
    %c0_7 = arith.constant 0 : index
    %10 = vector.load %arg5[%9, %c0_7] : memref<16x32xf32, #tpu.memory_space<vmem>>, vector<16x32xf32>
    %cst_8 = arith.constant dense<0.000000e+00> : vector<32x32xf32>
    %11 = tpu.matmul %4, %10, %cst_8 {dimension_numbers = #tpu.dot_dimension_numbers<[1], [0], [0], [1], [0, 0, 1, 1], [], []>} : vector<32x16xf32>, vector<16x32xf32>, vector<32x32xf32> -> vector<32x32xf32>
    %12 = arith.index_cast %8 : i32 to index
    %c0_9 = arith.constant 0 : index
    %13 = vector.load %arg4[%12, %c0_9] : memref<32x32xf32, #tpu.memory_space<vmem>>, vector<32x32xf32>
    tpu.vector_store %arg4[%12, %c0_9], %11 {strides = array<i32>} : memref<32x32xf32, #tpu.memory_space<vmem>>, vector<32x32xf32>,
    %c1_i32 = arith.constant 1 : i32
    return
  }
  func.func @transform_0(%arg0: i32) -> (i32, i32) {
    %c0_i32 = arith.constant 0 : i32
    %c0_i32_0 = arith.constant 0 : i32
    return %arg0, %c0_i32 : i32, i32
  }
  func.func @transform_1(%arg0: i32) -> (i32, i32) {
    %c0_i32 = arith.constant 0 : i32
    %c0_i32_0 = arith.constant 0 : i32
    %c0_i32_1 = arith.constant 0 : i32
    return %c0_i32, %c0_i32_0 : i32, i32
  }
  func.func @transform_2(%arg0: i32) -> (i32, i32) {
    %c0_i32 = arith.constant 0 : i32
    %c0_i32_0 = arith.constant 0 : i32
    %c0_i32_1 = arith.constant 0 : i32
    return %c0_i32, %c0_i32_0 : i32, i32
  }
  func.func @transform_3(%arg0: i32) -> (i32, i32) {
    %c0_i32 = arith.constant 0 : i32
    %c0_i32_0 = arith.constant 0 : i32
    return %arg0, %c0_i32 : i32, i32
  }
}

</mosaic_0001>

<llo_original>
// kernel: tpu_custom_call.1
$region0: #{tpu_custom_call.1}
  #allocation0 [shape = 'u32[]', space=smem, size = 0x4, offset = 0x4, fixed_abs, tag = 'smem constant byte address 0x4 - core index']
  #allocation1 [shape = 'u32[72,128]{1,0:T(1,128)}', space=vmem, size = 0x9000, scoped, tag = 'internal scratch']
  #allocation2 [shape = 'f32[16,32]{1,0:T(8,128)}', space=vmem, size = 0x2000, scoped, tag = 'scratch operand']
  %s0 = inlined_call_operand.vmem [shape: f32[128,16], index: 0, kind: input, shape index: {}]
  %s1 = inlined_call_operand.vmem [shape: f32[32,16], index: 1, kind: input, shape index: {}]
  %s2 = inlined_call_operand.vmem [shape: f32[16,32], index: 2, kind: input, shape index: {}]
  %s3 = inlined_call_operand.vmem [shape: f32[256,32], index: 3, kind: output, shape index: {}]
  %s4 = sld [smem:[#allocation0]]
  $region45: #{tpu_custom_call.1} parent=0
    _
  %s6 = ssub.s32 1, %s4
  %s7 = scalar_select 0, %s6, %s4
  loop: start=0, step=1, limit=10
  $region2: #{tpu_custom_call.1} parent=0 // loop_pre_header
    _
  $region3: #{tpu_custom_call.1} parent=0 // loop_header
    %s9 = sphi 0, %s13
    %p10 = scmp.ge.s32.totalorder %s9, 10
    %s19 = sphi 0, %s21
    %s22 = sphi 0, %s19
    %s23 = sphi 0, %s22
    %s39 = sphi 0, %s23
    %s43 = sphi 0, %s43
    %s45 = sphi 0, %s43
    %s46 = sphi 0, %s45
    %s60 = sphi 0, %s46
    %s64 = sphi 0, %s64
    %s66 = sphi 0, %s64
    %s67 = sphi 0, %s66
    %s81 = sphi 0, %s67
    %s87 = sphi 0, %s89
    %s90 = sphi 0, %s87
    %s91 = sphi 0, %s90
    %s107 = sphi 0, %s91
  $region4: #{tpu_custom_call.1} parent=0 // loop_header_branch
    %12 = sbr.rel (%p10) target = $region8
  $region5: #{tpu_custom_call.1} parent=0 // loop_body
    %s14 = ssub.s32 %s9, 1
    %s15 = ssub.s32 %s9, 2
    %s16 = sadd.s32 %s9, 1
    %s17 = ssub.s32 %s9, %s16
    %p18 = scmp.eq.s32.totalorder %s17, 0
    %s20 = sadd.s32 %s19, 1
    %s21 = scalar_select %p18, %s19, %s20
    %p24 = pneg %p18
    %p25 = scmp.eq.s32.totalorder %s9, 7
    %p26 = por %p24, %p25
    %p27 = scmp.ne.s32.totalorder %s19, %s22
    %p28 = scmp.eq.s32.totalorder %s9, 0
    %p29 = por %p27, %p28
    %p30 = scmp.ne.s32.totalorder %s19, %s22
    %p31 = scmp.eq.s32.totalorder %s14, 7
    %p32 = por %p30, %p31
    %p33 = scmp.ne.s32.totalorder %s22, %s23
    %p34 = scmp.eq.s32.totalorder %s14, 0
    %p35 = por %p33, %p34
    %p36 = scmp.ne.s32.totalorder %s22, %s23
    %p37 = scmp.eq.s32.totalorder %s15, 7
    %p38 = por %p36, %p37
    %p40 = scmp.ne.s32.totalorder %s23, %s39
    %p41 = scmp.eq.s32.totalorder %s15, 0
    %p42 = por %p40, %p41
    %s44 = sadd.s32 %s43, 1
    %p47 = scmp.eq.s32.totalorder %s9, 7
    %p48 = scmp.ne.s32.totalorder %s43, %s45
    %p49 = scmp.eq.s32.totalorder %s9, 0
    %p50 = por %p48, %p49
    %p51 = scmp.ne.s32.totalorder %s43, %s45
    %p52 = scmp.eq.s32.totalorder %s14, 7
    %p53 = por %p51, %p52
    %p54 = scmp.ne.s32.totalorder %s45, %s46
    %p55 = scmp.eq.s32.totalorder %s14, 0
    %p56 = por %p54, %p55
    %p57 = scmp.ne.s32.totalorder %s45, %s46
    %p58 = scmp.eq.s32.totalorder %s15, 7
    %p59 = por %p57, %p58
    %p61 = scmp.ne.s32.totalorder %s46, %s60
    %p62 = scmp.eq.s32.totalorder %s15, 0
    %p63 = por %p61, %p62
    %s65 = sadd.s32 %s64, 1
    %p68 = scmp.eq.s32.totalorder %s9, 7
    %p69 = scmp.ne.s32.totalorder %s64, %s66
    %p70 = scmp.eq.s32.totalorder %s9, 0
    %p71 = por %p69, %p70
    %p72 = scmp.ne.s32.totalorder %s64, %s66
    %p73 = scmp.eq.s32.totalorder %s14, 7
    %p74 = por %p72, %p73
    %p75 = scmp.ne.s32.totalorder %s66, %s67
    %p76 = scmp.eq.s32.totalorder %s14, 0
    %p77 = por %p75, %p76
    %p78 = scmp.ne.s32.totalorder %s66, %s67
    %p79 = scmp.eq.s32.totalorder %s15, 7
    %p80 = por %p78, %p79
    %p82 = scmp.ne.s32.totalorder %s67, %s81
    %p83 = scmp.eq.s32.totalorder %s15, 0
    %p84 = por %p82, %p83
    %s85 = ssub.s32 %s9, %s16
    %p86 = scmp.eq.s32.totalorder %s85, 0
    %s88 = sadd.s32 %s87, 1
    %s89 = scalar_select %p86, %s87, %s88
    %p92 = pneg %p86
    %p93 = scmp.eq.s32.totalorder %s9, 7
    %p94 = por %p92, %p93
    %p95 = scmp.ne.s32.totalorder %s87, %s90
    %p96 = scmp.eq.s32.totalorder %s9, 0
    %p97 = por %p95, %p96
    %p98 = scmp.ne.s32.totalorder %s87, %s90
    %p99 = scmp.eq.s32.totalorder %s14, 7
    %p100 = por %p98, %p99
    %p101 = scmp.ne.s32.totalorder %s90, %s91
    %p102 = scmp.eq.s32.totalorder %s14, 0
    %p103 = por %p101, %p102
    %p104 = scmp.ne.s32.totalorder %s90, %s91
    %p105 = scmp.eq.s32.totalorder %s15, 7
    %p106 = por %p104, %p105
    %p108 = scmp.ne.s32.totalorder %s91, %s107
    %p109 = scmp.eq.s32.totalorder %s15, 0
    %p110 = por %p108, %p109
    %p111 = scmp.le.s32.totalorder 1, %s9
    %p112 = scmp.lt.s32.totalorder %s9, 9
    %p113 = pnand %p111, %p112
    %p114 = pneg %p113
    // Predicated region
    $region9: #{tpu_custom_call.1} parent=5 // pred_check
      _
    $region10: #{tpu_custom_call.1} parent=5 // pred_check_branch
      %116 = sbr.rel (%p113) target = $region12
    $region11: #{tpu_custom_call.1} parent=5 // pred_region
      %s117 = ssub.s32 %s9, 1
      // Predicated region
      $region13: #{tpu_custom_call.1} parent=11 // pred_check
        %p118 = pneg %p56
      $region14: #{tpu_custom_call.1} parent=11 // pred_check_branch
        %120 = sbr.rel (%p118) target = $region16
      $region15: #{tpu_custom_call.1} parent=11 // pred_region
        _
      $region16: #{tpu_custom_call.1} parent=11 // pred_fallthru
        _
      // Predicated region
      $region17: #{tpu_custom_call.1} parent=11 // pred_check
        %p121 = pneg %p77
      $region18: #{tpu_custom_call.1} parent=11 // pred_check_branch
        %123 = sbr.rel (%p121) target = $region20
      $region19: #{tpu_custom_call.1} parent=11 // pred_region
        _
      $region20: #{tpu_custom_call.1} parent=11 // pred_fallthru
        _
    $region12: #{tpu_custom_call.1} parent=5 // pred_fallthru
      _
    %p124 = scmp.lt.s32.totalorder %s9, 8
    // Predicated region
    $region21: #{tpu_custom_call.1} parent=5 // pred_check
      %p125 = pneg %p124
    $region22: #{tpu_custom_call.1} parent=5 // pred_check_branch
      %127 = sbr.rel (%p125) target = $region24
    $region23: #{tpu_custom_call.1} parent=5 // pred_region
      // Predicated region
      $region25: #{tpu_custom_call.1} parent=23 // pred_check
        %p128 = pneg %p29
      $region26: #{tpu_custom_call.1} parent=23 // pred_check_branch
        %130 = sbr.rel (%p128) target = $region28
      $region27: #{tpu_custom_call.1} parent=23 // pred_region
        %s131 = smul.u32 2, %s9
        %p132 = scmp.lt.s32.totalorder %s131, 15
        %s133 = scalar_select %p132, %s131, 15
        %s134 = smul.addr %s133, 8
        %s135 = scalar_lea.vmem %s0, %s134
        %s136 = smul.u32 2, %s9
      $region28: #{tpu_custom_call.1} parent=23 // pred_fallthru
        _
    $region24: #{tpu_custom_call.1} parent=5 // pred_fallthru
      _
    %p137 = scmp.le.s32.totalorder 1, %s9
    %p138 = scmp.lt.s32.totalorder %s9, 9
    %p139 = pnand %p137, %p138
    %p140 = pneg %p139
    // Predicated region
    $region29: #{tpu_custom_call.1} parent=5 // pred_check
      _
    $region30: #{tpu_custom_call.1} parent=5 // pred_check_branch
      %142 = sbr.rel (%p139) target = $region32
    $region31: #{tpu_custom_call.1} parent=5 // pred_region
      %s143 = ssub.s32 %s9, 1
      %s144 = smul.u32 2, %s14
      %p145 = scmp.lt.s32.totalorder %s144, 15
      %s146 = scalar_select %p145, %s144, 15
      %s147 = smul.addr %s146, 8
      %s148 = scalar_lea.vmem %s0, %s147
      %p149 = pneg %p35
      %p150 = pneg %p32
      %p151 = pneg %p56
      %p152 = pneg %p53
      %p153 = pneg %p77
      %p154 = pneg %p74
      %p155 = pneg %p103
      %p156 = pneg %p100
      %s157 = smul.u32 4, %s14
      %p158 = scmp.lt.s32.totalorder %s157, 31
      %s159 = scalar_select %p158, %s157, 31
      %s160 = smul.addr %s159, 8
      %s161 = scalar_lea.vmem %s3, %s160
      %s162 = smul.u32 2, %s14
      %p163 = scmp.lt.s32.totalorder %s162, 15
      %s164 = scalar_select %p163, %s162, 15
      %s165 = smul.addr %s164, 8
      %s166 = scalar_lea.vmem %s0, %s165
      %s167 = smul.u32 2, %s14
      %s168 = smul.u32 4, %s14
      %p169 = scmp.lt.s32.totalorder %s168, 31
      %s170 = scalar_select %p169, %s168, 31
      %s171 = smul.addr %s170, 8
      %s172 = scalar_lea.vmem %s3, %s171
      %s173 = smul.u32 4, %s14
      %v174 = vld [vmem:[%s166] sm:$0xff]
      %v175 = vld [vmem:[%s166 + $0x8] sm:$0xff]
      %v176 = vld [vmem:[%s2] sm:$0xff]
      %v177 = vld [vmem:[%s2 + $0x8] sm:$0xff]
      %vm178 = vcmask 130048
      %v180 = vsel %vm178, %v174, 0
      %v183 = vsel %vm178, %v175, 0
      %185 = vmatpush.msra.mxu0 0.0
      %186 = vmatpush.msra.mxu0 0.0
      %187 = vmatpush.msra.mxu0 0.0
      %188 = vmatpush.msra.mxu0 0.0
      %189 = vmatpush.msra.mxu0 0.0
      %190 = vmatpush.msra.mxu0 0.0
      %191 = vmatpush.msra.mxu0 0.0
      %192 = vmatpush.msra.mxu0 0.0
      %193 = vmatpush.msra.mxu0 0.0
      %194 = vmatpush.msra.mxu0 0.0
      %195 = vmatpush.msra.mxu0 0.0
      %196 = vmatpush.msra.mxu0 0.0
      %197 = vmatpush.msra.mxu0 0.0
      %198 = vmatpush.msra.mxu0 0.0
      %199 = vmatpush.msra.mxu0 %v177
      %200 = vmatpush.msra.mxu0 %v176
      %201 = vmatmul.f32.gmra.mxu0 %v180
      %v202 = vpop.f32.mrf.mxu0
      %v203 = vadd.f32 0.0, %v202
      %204 = vmatmul.f32.gmra.mxu0 %v183
      %v205 = vpop.f32.mrf.mxu0
      %v206 = vadd.f32 0.0, %v205
      %207 = vdwg.mxu0
      %vm208 = vcmask 261120
      %209 = vst.msk [vmem:[#allocation2] sm:$0xff] %vm208, %v203
      %210 = vst.msk [vmem:[#allocation2 + $0x8] sm:$0xff] %vm208, %v206
      %v211 = vld [vmem:[%s1] sm:$0xff]
      %v212 = vld [vmem:[%s1 + $0x8] sm:$0xff]
      %v213 = vld [vmem:[%s1 + $0x10] sm:$0xff]
      %v214 = vld [vmem:[%s1 + $0x18] sm:$0xff]
      %v215 = vld [vmem:[#allocation2] sm:$0xff]
      %v216 = vld [vmem:[#allocation2 + $0x8] sm:$0xff]
      %v218 = vsel %vm178, %v211, 0
      %v221 = vsel %vm178, %v212, 0
      %v224 = vsel %vm178, %v213, 0
      %v227 = vsel %vm178, %v214, 0
      %229 = vmatpush.msra.mxu0 0.0
      %230 = vmatpush.msra.mxu0 0.0
      %231 = vmatpush.msra.mxu0 0.0
      %232 = vmatpush.msra.mxu0 0.0
      %233 = vmatpush.msra.mxu0 0.0
      %234 = vmatpush.msra.mxu0 0.0
      %235 = vmatpush.msra.mxu0 0.0
      %236 = vmatpush.msra.mxu0 0.0
      %237 = vmatpush.msra.mxu0 0.0
      %238 = vmatpush.msra.mxu0 0.0
      %239 = vmatpush.msra.mxu0 0.0
      %240 = vmatpush.msra.mxu0 0.0
      %241 = vmatpush.msra.mxu0 0.0
      %242 = vmatpush.msra.mxu0 0.0
      %243 = vmatpush.msra.mxu0 %v216
      %244 = vmatpush.msra.mxu0 %v215
      %245 = vmatmul.f32.gmra.mxu0 %v218
      %v246 = vpop.f32.mrf.mxu0
      %v247 = vadd.f32 0.0, %v246
      %248 = vmatmul.f32.gmra.mxu0 %v221
      %v249 = vpop.f32.mrf.mxu0
      %v250 = vadd.f32 0.0, %v249
      %251 = vmatmul.f32.gmra.mxu0 %v224
      %v252 = vpop.f32.mrf.mxu0
      %v253 = vadd.f32 0.0, %v252
      %254 = vmatmul.f32.gmra.mxu0 %v227
      %v255 = vpop.f32.mrf.mxu0
      %v256 = vadd.f32 0.0, %v255
      %257 = vdwg.mxu0
      %258 = vst.msk [vmem:[%s172] sm:$0xff] %vm208, %v247
      %259 = vst.msk [vmem:[%s172 + $0x8] sm:$0xff] %vm208, %v250
      %260 = vst.msk [vmem:[%s172 + $0x10] sm:$0xff] %vm208, %v253
      %261 = vst.msk [vmem:[%s172 + $0x18] sm:$0xff] %vm208, %v256
      %s262 = smul.u32 4, %s14
      %p263 = scmp.lt.s32.totalorder %s262, 31
      %s264 = scalar_select %p263, %s262, 31
      %s265 = smul.addr %s264, 8
      %s266 = scalar_lea.vmem %s3, %s265
      // Predicated region
      $region33: #{tpu_custom_call.1} parent=31 // pred_check
        %p267 = pneg %p100
      $region34: #{tpu_custom_call.1} parent=31 // pred_check_branch
        %269 = sbr.rel (%p267) target = $region36
      $region35: #{tpu_custom_call.1} parent=31 // pred_region
        %s270 = smul.u32 4, %s14
      $region36: #{tpu_custom_call.1} parent=31 // pred_fallthru
        _
    $region32: #{tpu_custom_call.1} parent=5 // pred_fallthru
      _
    %p271 = scmp.le.s32.totalorder 2, %s9
    // Predicated region
    $region37: #{tpu_custom_call.1} parent=5 // pred_check
      %p272 = pneg %p271
    $region38: #{tpu_custom_call.1} parent=5 // pred_check_branch
      %274 = sbr.rel (%p272) target = $region40
    $region39: #{tpu_custom_call.1} parent=5 // pred_region
      %s275 = ssub.s32 %s9, 2
      // Predicated region
      $region41: #{tpu_custom_call.1} parent=39 // pred_check
        %p276 = pneg %p106
      $region42: #{tpu_custom_call.1} parent=39 // pred_check_branch
        %278 = sbr.rel (%p276) target = $region44
      $region43: #{tpu_custom_call.1} parent=39 // pred_region
        %s279 = smul.u32 4, %s15
        %p280 = scmp.lt.s32.totalorder %s279, 31
        %s281 = scalar_select %p280, %s279, 31
        %s282 = smul.addr %s281, 8
        %s283 = scalar_lea.vmem %s3, %s282
      $region44: #{tpu_custom_call.1} parent=39 // pred_fallthru
        _
    $region40: #{tpu_custom_call.1} parent=5 // pred_fallthru
      _
  $region6: #{tpu_custom_call.1} parent=0 // loop_footer
    %s13 = sadd.s32 1, %s9
  $region7: #{tpu_custom_call.1} parent=0 // loop_footer_branch
    %8 = sbr.rel target = $region3
  $region8: #{tpu_custom_call.1} parent=0 // loop_exit
    _

</llo_original>
